<compile_context>
chip_gen: v7x
topology: tpu7x:2x2x1
jax: 0.10.0
libtpu: 0.0.40
codegen_flags: <defaults>
</compile_context>

<pallas_src>
import functools

import jax
import jax.numpy as jnp
from jax import lax
from jax.experimental import pallas as pl
from jax.experimental.pallas import tpu as pltpu


def _cnn_kernel(patches_ref, wc_ref, bc_ref, w1t_ref, b1_ref, w2t_ref, b2_ref,
                out_ref, *, N, R, F, n_taps):
    """conv(GEMM) -> 2x2/2 maxpool -> bias+ReLU -> fc1 -> ReLU -> fc2."""
    NR = N * R

    # ---- conv1 as one transposed GEMM (MXU): (F, KKCp) x (KKCp, taps*NR) -----
    acc = jnp.dot(wc_ref[...], patches_ref[...],
                  preferred_element_type=jnp.float32)         # (F, n_taps*NR)

    # ---- 2x2 max pool, stride 2: taps are 128-aligned lane blocks (VPU) ------
    # bias-add and ReLU commute with max (both monotone), so pool first.
    pooled = acc[:, 0:NR]
    for t in range(1, n_taps):
        pooled = jnp.maximum(pooled, acc[:, t * NR:(t + 1) * NR])
    pooled = jnp.maximum(pooled + bc_ref[...], 0.0)           # (F, NR)

    # ---- relayout pooled (F, N*R) -> P (N, F*R), PyTorch (f,h2,w2) order -----
    # ~1 vreg of payload; static slices + concats only (no in-kernel reshape).
    rows = []
    for n in range(N):
        pieces = [pooled[f:f + 1, n * R:(n + 1) * R] for f in range(F)]
        rows.append(jnp.concatenate(pieces, axis=1))          # (1, F*R)
    p = jnp.concatenate(rows, axis=0)                         # (N, F*R)

    # ---- fc1 (+ dropout) + ReLU: single MXU matmul ---------------------------
    # TODO(synk): F.dropout(x) in the PyTorch forward uses defaults (p=0.5,
    # training=True) and is stochastic; modeled as identity (inference).
    h = jnp.dot(p, w1t_ref[...], preferred_element_type=jnp.float32)
    h = jnp.maximum(h + b1_ref[...], 0.0)                     # (N, hidden)

    # ---- fc2 + one dense store of all logits ---------------------------------
    logits = jnp.dot(h, w2t_ref[...], preferred_element_type=jnp.float32)
    out_ref[...] = logits + b2_ref[...]                       # (N, classes)


def classification_cnn_forward(x_nchw, Wc, bc, W1, b1, W2, b2, *,
                               kernel_size, pool=2):
    N, C, H, Wd = x_nchw.shape
    F = Wc.shape[0]
    K = kernel_size
    pad = (K - 1) // 2
    hidden = W1.shape[0]
    classes = W2.shape[0]
    assert pool == 2 and H % pool == 0 and Wd % pool == 0, \
        "kernel specialized for the module's default 2x2/2 max pooling"
    H2, W2d = H // pool, Wd // pool
    R = H2 * W2d
    NR = N * R
    n_taps = pool * pool
    KKC = K * K * C
    KKCp = ((KKC + 127) // 128) * 128      # pad conv contraction dim to lanes

    # --- glue: pad + im2col; contraction row j = (ky*K + kx)*C + c ------------
    # TODO(synk): at larger H/W/C/N this wrapper im2col is the HBM-traffic
    # bottleneck (~K^2 blowup); do tap extraction in-kernel from an (N,H,W,C)
    # VMEM block with pl.ds slices instead.
    xp = jnp.pad(x_nchw, ((0, 0), (0, 0), (pad, pad), (pad, pad)))
    taps = [xp[:, :, ky:ky + H, kx:kx + Wd] for ky in range(K) for kx in range(K)]
    pat = jnp.stack(taps, axis=1)                          # (N, K*K, C, H, W)
    pat = pat.transpose(0, 3, 4, 1, 2).reshape(N, H, Wd, KKC)
    # group columns by pooling tap: block (dy, dx) holds columns ordered (n, h2, w2)
    blocks = [pat[:, dy::pool, dx::pool, :].reshape(NR, KKC)
              for dy in range(pool) for dx in range(pool)]
    patches = jnp.concatenate(blocks, axis=0)              # (n_taps*NR, KKC)
    patches_t = jnp.pad(patches, ((0, 0), (0, KKCp - KKC))).T  # (KKCp, n_taps*NR)

    # --- glue: parameter re-layout to the kernel's conventions ----------------
    wc_t = Wc.transpose(0, 2, 3, 1).reshape(F, KKC)        # col j = (ky*K+kx)*C+c
    wc_t = jnp.pad(wc_t, ((0, 0), (0, KKCp - KKC)))        # (F, KKCp)
    bcv = bc.reshape(F, 1)
    w1t = W1.T                                             # (F*R, hidden), row f*R+r
    b1v = b1.reshape(1, hidden)
    w2t = W2.T                                             # (hidden, classes)
    b2v = b2.reshape(1, classes)

    kernel = functools.partial(_cnn_kernel, N=N, R=R, F=F, n_taps=n_taps)
    vmem = pl.BlockSpec(memory_space=pltpu.MemorySpace.VMEM)
    return pl.pallas_call(
        kernel,
        out_shape=jax.ShapeDtypeStruct((N, classes), jnp.float32),
        in_specs=[vmem] * 7,
        out_specs=vmem,
    )(patches_t, wc_t, bcv, w1t, b1v, w2t, b2v)


def reference_forward(x, Wc, bc, W1, b1, W2, b2, pool=2):
    """Pure-JAX NCHW reference mirroring the PyTorch forward (dropout=identity)."""
    K = Wc.shape[2]
    pad = (K - 1) // 2
    y = lax.conv_general_dilated(
        x, Wc, window_strides=(1, 1), padding=[(pad, pad), (pad, pad)],
        dimension_numbers=("NCHW", "OIHW", "NCHW"))
    y = y + bc[None, :, None, None]
    y = jnp.maximum(y, 0.0)
    y = lax.reduce_window(y, -jnp.inf, lax.max,
                          (1, 1, pool, pool), (1, 1, pool, pool), "VALID")
    y = y.reshape(x.shape[0], -1)                 # CHW flatten, like .view()
    y = y @ W1.T + b1
    y = jnp.maximum(y, 0.0)                       # dropout treated as identity
    y = y @ W2.T + b2
    return y


if __name__ == "__main__":
    # Small shapes consistent with the module: input_dim=(3, 16, 16),
    # num_filters=8, kernel_size=5 (padding=2), pool=2/stride 2,
    # hidden_dim=32, num_classes=10, batch N=2.
    N, C, H, W = 2, 3, 16, 16
    F, K, hidden, classes = 8, 5, 32, 10
    weight_scale = 0.05   # synthetic deterministic init (mirrors conv weight scaling)

    key = jax.random.PRNGKey(0)
    kx, kc, kbc, k1, kb1, k2, kb2 = jax.random.split(key, 7)
    x = jax.random.normal(kx, (N, C, H, W), jnp.float32)
    Wc = jax.random.normal(kc, (F, C, K, K), jnp.float32) * weight_scale
    bc = jax.random.normal(kbc, (F,), jnp.float32) * 0.1
    Dflat = F * (H // 2) * (W // 2)
    W1 = jax.random.normal(k1, (hidden, Dflat), jnp.float32) * 0.05
    b1 = jax.random.normal(kb1, (hidden,), jnp.float32) * 0.1
    W2 = jax.random.normal(k2, (classes, hidden), jnp.float32) * 0.05
    b2 = jax.random.normal(kb2, (classes,), jnp.float32) * 0.1

    out = classification_cnn_forward(x, Wc, bc, W1, b1, W2, b2, kernel_size=K)
    out = jax.block_until_ready(out)

    ref = reference_forward(x, Wc, bc, W1, b1, W2, b2)
    assert out.shape == (N, classes), out.shape
    assert jnp.allclose(out, ref, rtol=1e-4, atol=1e-4), (out, ref)
    print("KERNEL_OK")
</pallas_src>

<mosaic_0001>
module attributes {stable_mosaic.version = 11 : i64} {
  func.func @_cnn_kernel(%arg0: memref<128x512xf32, #tpu.memory_space<vmem>>, %arg1: memref<8x128xf32, #tpu.memory_space<vmem>>, %arg2: memref<8x1xf32, #tpu.memory_space<vmem>>, %arg3: memref<512x32xf32, #tpu.memory_space<vmem>>, %arg4: memref<1x32xf32, #tpu.memory_space<vmem>>, %arg5: memref<32x10xf32, #tpu.memory_space<vmem>>, %arg6: memref<1x10xf32, #tpu.memory_space<vmem>>, %arg7: memref<2x10xf32, #tpu.memory_space<vmem>>) attributes {dimension_semantics = [], scalar_prefetch = 0 : i64, scratch_operands = 0 : i64, tpu.core_type = #tpu.core_type<tc>} {
    %c0 = arith.constant 0 : index
    %c0_0 = arith.constant 0 : index
    %0 = vector.load %arg1[%c0, %c0_0] : memref<8x128xf32, #tpu.memory_space<vmem>>, vector<8x128xf32>
    %c0_1 = arith.constant 0 : index
    %c0_2 = arith.constant 0 : index
    %1 = vector.load %arg0[%c0_1, %c0_2] : memref<128x512xf32, #tpu.memory_space<vmem>>, vector<128x512xf32>
    %cst = arith.constant dense<0.000000e+00> : vector<8x512xf32>
    %2 = tpu.matmul %0, %1, %cst {dimension_numbers = #tpu.dot_dimension_numbers<[1], [0], [0], [1], [0, 0, 1, 1], [], []>} : vector<8x128xf32>, vector<128x512xf32>, vector<8x512xf32> -> vector<8x512xf32>
    %3 = vector.extract_strided_slice %2 {offsets = [0, 0], sizes = [8, 128], strides = [1, 1]} : vector<8x512xf32> to vector<8x128xf32>
    %4 = vector.extract_strided_slice %2 {offsets = [0, 128], sizes = [8, 128], strides = [1, 1]} : vector<8x512xf32> to vector<8x128xf32>
    %5 = arith.maximumf %3, %4 : vector<8x128xf32>
    %6 = vector.extract_strided_slice %2 {offsets = [0, 256], sizes = [8, 128], strides = [1, 1]} : vector<8x512xf32> to vector<8x128xf32>
    %7 = arith.maximumf %5, %6 : vector<8x128xf32>
    %8 = vector.extract_strided_slice %2 {offsets = [0, 384], sizes = [8, 128], strides = [1, 1]} : vector<8x512xf32> to vector<8x128xf32>
    %9 = arith.maximumf %7, %8 : vector<8x128xf32>
    %c0_3 = arith.constant 0 : index
    %c0_4 = arith.constant 0 : index
    %10 = vector.load %arg2[%c0_3, %c0_4] : memref<8x1xf32, #tpu.memory_space<vmem>>, vector<8x1xf32>
    %11 = vector.broadcast %10 : vector<8x1xf32> to vector<8x128xf32>
    %12 = arith.addf %9, %11 : vector<8x128xf32>
    %cst_5 = arith.constant 0.000000e+00 : f32
    %13 = vector.broadcast %cst_5 : f32 to vector<8x128xf32>
    %14 = arith.maximumf %12, %13 : vector<8x128xf32>
    %15 = vector.extract_strided_slice %14 {offsets = [0, 0], sizes = [1, 64], strides = [1, 1]} : vector<8x128xf32> to vector<1x64xf32>
    %16 = vector.extract_strided_slice %14 {offsets = [1, 0], sizes = [1, 64], strides = [1, 1]} : vector<8x128xf32> to vector<1x64xf32>
    %17 = vector.extract_strided_slice %14 {offsets = [2, 0], sizes = [1, 64], strides = [1, 1]} : vector<8x128xf32> to vector<1x64xf32>
    %18 = vector.extract_strided_slice %14 {offsets = [3, 0], sizes = [1, 64], strides = [1, 1]} : vector<8x128xf32> to vector<1x64xf32>
    %19 = vector.extract_strided_slice %14 {offsets = [4, 0], sizes = [1, 64], strides = [1, 1]} : vector<8x128xf32> to vector<1x64xf32>
    %20 = vector.extract_strided_slice %14 {offsets = [5, 0], sizes = [1, 64], strides = [1, 1]} : vector<8x128xf32> to vector<1x64xf32>
    %21 = vector.extract_strided_slice %14 {offsets = [6, 0], sizes = [1, 64], strides = [1, 1]} : vector<8x128xf32> to vector<1x64xf32>
    %22 = vector.extract_strided_slice %14 {offsets = [7, 0], sizes = [1, 64], strides = [1, 1]} : vector<8x128xf32> to vector<1x64xf32>
    %23 = tpu.concatenate %15, %16, %17, %18, %19, %20, %21, %22 in 1 : vector<1x64xf32>, vector<1x64xf32>, vector<1x64xf32>, vector<1x64xf32>, vector<1x64xf32>, vector<1x64xf32>, vector<1x64xf32>, vector<1x64xf32> -> vector<1x512xf32>
    %24 = vector.extract_strided_slice %14 {offsets = [0, 64], sizes = [1, 64], strides = [1, 1]} : vector<8x128xf32> to vector<1x64xf32>
    %25 = vector.extract_strided_slice %14 {offsets = [1, 64], sizes = [1, 64], strides = [1, 1]} : vector<8x128xf32> to vector<1x64xf32>
    %26 = vector.extract_strided_slice %14 {offsets = [2, 64], sizes = [1, 64], strides = [1, 1]} : vector<8x128xf32> to vector<1x64xf32>
    %27 = vector.extract_strided_slice %14 {offsets = [3, 64], sizes = [1, 64], strides = [1, 1]} : vector<8x128xf32> to vector<1x64xf32>
    %28 = vector.extract_strided_slice %14 {offsets = [4, 64], sizes = [1, 64], strides = [1, 1]} : vector<8x128xf32> to vector<1x64xf32>
    %29 = vector.extract_strided_slice %14 {offsets = [5, 64], sizes = [1, 64], strides = [1, 1]} : vector<8x128xf32> to vector<1x64xf32>
    %30 = vector.extract_strided_slice %14 {offsets = [6, 64], sizes = [1, 64], strides = [1, 1]} : vector<8x128xf32> to vector<1x64xf32>
    %31 = vector.extract_strided_slice %14 {offsets = [7, 64], sizes = [1, 64], strides = [1, 1]} : vector<8x128xf32> to vector<1x64xf32>
    %32 = tpu.concatenate %24, %25, %26, %27, %28, %29, %30, %31 in 1 : vector<1x64xf32>, vector<1x64xf32>, vector<1x64xf32>, vector<1x64xf32>, vector<1x64xf32>, vector<1x64xf32>, vector<1x64xf32>, vector<1x64xf32> -> vector<1x512xf32>
    %33 = tpu.concatenate %23, %32 in 0 : vector<1x512xf32>, vector<1x512xf32> -> vector<2x512xf32>
    %c0_6 = arith.constant 0 : index
    %c0_7 = arith.constant 0 : index
    %34 = vector.load %arg3[%c0_6, %c0_7] : memref<512x32xf32, #tpu.memory_space<vmem>>, vector<512x32xf32>
    %cst_8 = arith.constant dense<0.000000e+00> : vector<2x32xf32>
    %35 = tpu.matmul %33, %34, %cst_8 {dimension_numbers = #tpu.dot_dimension_numbers<[1], [0], [0], [1], [0, 0, 1, 1], [], []>} : vector<2x512xf32>, vector<512x32xf32>, vector<2x32xf32> -> vector<2x32xf32>
    %c0_9 = arith.constant 0 : index
    %c0_10 = arith.constant 0 : index
    %36 = vector.load %arg4[%c0_9, %c0_10] : memref<1x32xf32, #tpu.memory_space<vmem>>, vector<1x32xf32>
    %37 = vector.broadcast %36 : vector<1x32xf32> to vector<2x32xf32>
    %38 = arith.addf %35, %37 : vector<2x32xf32>
    %cst_11 = arith.constant 0.000000e+00 : f32
    %39 = vector.broadcast %cst_11 : f32 to vector<2x32xf32>
    %40 = arith.maximumf %38, %39 : vector<2x32xf32>
    %c0_12 = arith.constant 0 : index
    %c0_13 = arith.constant 0 : index
    %41 = vector.load %arg5[%c0_12, %c0_13] : memref<32x10xf32, #tpu.memory_space<vmem>>, vector<32x10xf32>
    %cst_14 = arith.constant dense<0.000000e+00> : vector<2x10xf32>
    %42 = tpu.matmul %40, %41, %cst_14 {dimension_numbers = #tpu.dot_dimension_numbers<[1], [0], [0], [1], [0, 0, 1, 1], [], []>} : vector<2x32xf32>, vector<32x10xf32>, vector<2x10xf32> -> vector<2x10xf32>
    %c0_15 = arith.constant 0 : index
    %c0_16 = arith.constant 0 : index
    %43 = vector.load %arg6[%c0_15, %c0_16] : memref<1x10xf32, #tpu.memory_space<vmem>>, vector<1x10xf32>
    %44 = vector.broadcast %43 : vector<1x10xf32> to vector<2x10xf32>
    %45 = arith.addf %42, %44 : vector<2x10xf32>
    %c0_17 = arith.constant 0 : index
    %c0_18 = arith.constant 0 : index
    %46 = vector.load %arg7[%c0_17, %c0_18] : memref<2x10xf32, #tpu.memory_space<vmem>>, vector<2x10xf32>
    tpu.vector_store %arg7[%c0_17, %c0_18], %45 {strides = array<i32>} : memref<2x10xf32, #tpu.memory_space<vmem>>, vector<2x10xf32>,
    return
  }
}

</mosaic_0001>

<llo_original>
// kernel: tpu_custom_call.1
$region0: #{tpu_custom_call.1}
  #allocation0 [shape = 'u32[]', space=smem, size = 0x4, offset = 0x4, fixed_abs, tag = 'smem constant byte address 0x4 - core index']
  #allocation1 [shape = 'u32[144,128]{1,0:T(1,128)}', space=vmem, size = 0x12000, scoped, tag = 'internal scratch']
  %s0 = inlined_call_operand.vmem [shape: f32[128,512], index: 0, kind: input, shape index: {}]
  %s1 = inlined_call_operand.vmem [shape: f32[8,128], index: 1, kind: input, shape index: {}]
  %s2 = inlined_call_operand.vmem [shape: f32[8,1], index: 2, kind: input, shape index: {}]
  %s3 = inlined_call_operand.vmem [shape: f32[512,32], index: 3, kind: input, shape index: {}]
  %s4 = inlined_call_operand.vmem [shape: f32[1,32], index: 4, kind: input, shape index: {}]
  %s5 = inlined_call_operand.vmem [shape: f32[32,10], index: 5, kind: input, shape index: {}]
  %s6 = inlined_call_operand.vmem [shape: f32[1,10], index: 6, kind: input, shape index: {}]
  %s7 = inlined_call_operand.hbm [shape: f32[2,10], index: 7, kind: output, shape index: {}]
  %s8 = sld [smem:[#allocation0]]
  $region38: #{tpu_custom_call.1} parent=0
    _
  %s10 = ssub.s32 1, %s8
  %s11 = scalar_select 0, %s10, %s8
  $region1: #{tpu_custom_call.1} parent=0
    #allocation2 [shape = 'u8[1024]{0}', space=vmem, size = 0x400, scoped, tag = 'output window, operand 0, single buffered']
    #allocation3 [shape = 's32[1]{0}', space=sflag, size = 0x4, scoped, tag = 'scoped memory for tpu_custom_call.1']
    %12 = vsyncpa [#allocation3], 0
    // Predicated region
    $region2: #{tpu_custom_call.1} parent=1 // pred_check
      _
    $region3: #{tpu_custom_call.1} parent=1 // pred_check_branch
      %14 = sbr.rel (0) target = $region5
    $region4: #{tpu_custom_call.1} parent=1 // pred_region
      _
    $region5: #{tpu_custom_call.1} parent=1 // pred_fallthru
      _
    // Predicated region
    $region6: #{tpu_custom_call.1} parent=1 // pred_check
      _
    $region7: #{tpu_custom_call.1} parent=1 // pred_check_branch
      %16 = sbr.rel (0) target = $region9
    $region8: #{tpu_custom_call.1} parent=1 // pred_region
      _
    $region9: #{tpu_custom_call.1} parent=1 // pred_fallthru
      _
    // Predicated region
    $region10: #{tpu_custom_call.1} parent=1 // pred_check
      _
    $region11: #{tpu_custom_call.1} parent=1 // pred_check_branch
      %18 = sbr.rel (0) target = $region13
    $region12: #{tpu_custom_call.1} parent=1 // pred_region
      _
    $region13: #{tpu_custom_call.1} parent=1 // pred_fallthru
      _
    // Predicated region
    $region14: #{tpu_custom_call.1} parent=1 // pred_check
      _
    $region15: #{tpu_custom_call.1} parent=1 // pred_check_branch
      %20 = sbr.rel (0) target = $region17
    $region16: #{tpu_custom_call.1} parent=1 // pred_region
      _
    $region17: #{tpu_custom_call.1} parent=1 // pred_fallthru
      _
    // Predicated region
    $region18: #{tpu_custom_call.1} parent=1 // pred_check
      _
    $region19: #{tpu_custom_call.1} parent=1 // pred_check_branch
      %22 = sbr.rel (0) target = $region21
    $region20: #{tpu_custom_call.1} parent=1 // pred_region
      _
    $region21: #{tpu_custom_call.1} parent=1 // pred_fallthru
      _
    // Predicated region
    $region22: #{tpu_custom_call.1} parent=1 // pred_check
      _
    $region23: #{tpu_custom_call.1} parent=1 // pred_check_branch
      %24 = sbr.rel (0) target = $region25
    $region24: #{tpu_custom_call.1} parent=1 // pred_region
      _
    $region25: #{tpu_custom_call.1} parent=1 // pred_fallthru
      _
    // Predicated region
    $region26: #{tpu_custom_call.1} parent=1 // pred_check
      _
    $region27: #{tpu_custom_call.1} parent=1 // pred_check_branch
      %26 = sbr.rel (0) target = $region29
    $region28: #{tpu_custom_call.1} parent=1 // pred_region
      _
    $region29: #{tpu_custom_call.1} parent=1 // pred_fallthru
      _
    %v27 = vld [vmem:[%s1] sm:$0xff]
    %v28 = vld [vmem:[%s0] sm:$0xff]
    %v29 = vld [vmem:[%s0 + $0x8] sm:$0xff]
    %v30 = vld [vmem:[%s0 + $0x10] sm:$0xff]
    %v31 = vld [vmem:[%s0 + $0x18] sm:$0xff]
    %v32 = vld [vmem:[%s0 + $0x20] sm:$0xff]
    %v33 = vld [vmem:[%s0 + $0x28] sm:$0xff]
    %v34 = vld [vmem:[%s0 + $0x30] sm:$0xff]
    %v35 = vld [vmem:[%s0 + $0x38] sm:$0xff]
    %v36 = vld [vmem:[%s0 + $0x40] sm:$0xff]
    %v37 = vld [vmem:[%s0 + $0x48] sm:$0xff]
    %v38 = vld [vmem:[%s0 + $0x50] sm:$0xff]
    %v39 = vld [vmem:[%s0 + $0x58] sm:$0xff]
    %v40 = vld [vmem:[%s0 + $0x60] sm:$0xff]
    %v41 = vld [vmem:[%s0 + $0x68] sm:$0xff]
    %v42 = vld [vmem:[%s0 + $0x70] sm:$0xff]
    %v43 = vld [vmem:[%s0 + $0x78] sm:$0xff]
    %v44 = vld [vmem:[%s0 + $0x80] sm:$0xff]
    %v45 = vld [vmem:[%s0 + $0x88] sm:$0xff]
    %v46 = vld [vmem:[%s0 + $0x90] sm:$0xff]
    %v47 = vld [vmem:[%s0 + $0x98] sm:$0xff]
    %v48 = vld [vmem:[%s0 + $0xa0] sm:$0xff]
    %v49 = vld [vmem:[%s0 + $0xa8] sm:$0xff]
    %v50 = vld [vmem:[%s0 + $0xb0] sm:$0xff]
    %v51 = vld [vmem:[%s0 + $0xb8] sm:$0xff]
    %v52 = vld [vmem:[%s0 + $0xc0] sm:$0xff]
    %v53 = vld [vmem:[%s0 + $0xc8] sm:$0xff]
    %v54 = vld [vmem:[%s0 + $0xd0] sm:$0xff]
    %v55 = vld [vmem:[%s0 + $0xd8] sm:$0xff]
    %v56 = vld [vmem:[%s0 + $0xe0] sm:$0xff]
    %v57 = vld [vmem:[%s0 + $0xe8] sm:$0xff]
    %v58 = vld [vmem:[%s0 + $0xf0] sm:$0xff]
    %v59 = vld [vmem:[%s0 + $0xf8] sm:$0xff]
    %v60 = vld [vmem:[%s0 + $0x100] sm:$0xff]
    %v61 = vld [vmem:[%s0 + $0x108] sm:$0xff]
    %v62 = vld [vmem:[%s0 + $0x110] sm:$0xff]
    %v63 = vld [vmem:[%s0 + $0x118] sm:$0xff]
    %v64 = vld [vmem:[%s0 + $0x120] sm:$0xff]
    %v65 = vld [vmem:[%s0 + $0x128] sm:$0xff]
    %v66 = vld [vmem:[%s0 + $0x130] sm:$0xff]
    %v67 = vld [vmem:[%s0 + $0x138] sm:$0xff]
    %v68 = vld [vmem:[%s0 + $0x140] sm:$0xff]
    %v69 = vld [vmem:[%s0 + $0x148] sm:$0xff]
    %v70 = vld [vmem:[%s0 + $0x150] sm:$0xff]
    %v71 = vld [vmem:[%s0 + $0x158] sm:$0xff]
    %v72 = vld [vmem:[%s0 + $0x160] sm:$0xff]
    %v73 = vld [vmem:[%s0 + $0x168] sm:$0xff]
    %v74 = vld [vmem:[%s0 + $0x170] sm:$0xff]
    %v75 = vld [vmem:[%s0 + $0x178] sm:$0xff]
    %v76 = vld [vmem:[%s0 + $0x180] sm:$0xff]
    %v77 = vld [vmem:[%s0 + $0x188] sm:$0xff]
    %v78 = vld [vmem:[%s0 + $0x190] sm:$0xff]
    %v79 = vld [vmem:[%s0 + $0x198] sm:$0xff]
    %v80 = vld [vmem:[%s0 + $0x1a0] sm:$0xff]
    %v81 = vld [vmem:[%s0 + $0x1a8] sm:$0xff]
    %v82 = vld [vmem:[%s0 + $0x1b0] sm:$0xff]
    %v83 = vld [vmem:[%s0 + $0x1b8] sm:$0xff]
    %v84 = vld [vmem:[%s0 + $0x1c0] sm:$0xff]
    %v85 = vld [vmem:[%s0 + $0x1c8] sm:$0xff]
    %v86 = vld [vmem:[%s0 + $0x1d0] sm:$0xff]
    %v87 = vld [vmem:[%s0 + $0x1d8] sm:$0xff]
    %v88 = vld [vmem:[%s0 + $0x1e0] sm:$0xff]
    %v89 = vld [vmem:[%s0 + $0x1e8] sm:$0xff]
    %v90 = vld [vmem:[%s0 + $0x1f0] sm:$0xff]
    %v91 = vld [vmem:[%s0 + $0x1f8] sm:$0xff]
    %92 = vmatprep.subr.mxu0 %v29
    %93 = vmatpush1.msra.mxu0 %v28
    %94 = vmatprep.subr.mxu0 %v33
    %95 = vmatpush1.msra.mxu0 %v32
    %96 = vmatprep.subr.mxu0 %v37
    %97 = vmatpush1.msra.mxu0 %v36
    %98 = vmatprep.subr.mxu0 %v41
    %99 = vmatpush1.msra.mxu0 %v40
    %100 = vmatprep.subr.mxu0 %v45
    %101 = vmatpush1.msra.mxu0 %v44
    %102 = vmatprep.subr.mxu0 %v49
    %103 = vmatpush1.msra.mxu0 %v48
    %104 = vmatprep.subr.mxu0 %v53
    %105 = vmatpush1.msra.mxu0 %v52
    %106 = vmatprep.subr.mxu0 %v57
    %107 = vmatpush1.msra.mxu0 %v56
    %108 = vmatprep.subr.mxu0 %v61
    %109 = vmatpush1.msra.mxu0 %v60
    %110 = vmatprep.subr.mxu0 %v65
    %111 = vmatpush1.msra.mxu0 %v64
    %112 = vmatprep.subr.mxu0 %v69
    %113 = vmatpush1.msra.mxu0 %v68
    %114 = vmatprep.subr.mxu0 %v73
    %115 = vmatpush1.msra.mxu0 %v72
    %116 = vmatprep.subr.mxu0 %v77
    %117 = vmatpush1.msra.mxu0 %v76
    %118 = vmatprep.subr.mxu0 %v81
    %119 = vmatpush1.msra.mxu0 %v80
    %120 = vmatprep.subr.mxu0 %v85
    %121 = vmatpush1.msra.mxu0 %v84
    %122 = vmatprep.subr.mxu0 %v89
    %123 = vmatpush1.msra.mxu0 %v88
    %124 = vmatprep.subr.mxu0 0.0
    %125 = vmatpush1.msra.mxu0 0.0
    %126 = vmatprep.subr.mxu0 0.0
    %127 = vmatpush1.msra.mxu0 0.0
    %128 = vmatprep.subr.mxu0 0.0
    %129 = vmatpush1.msra.mxu0 0.0
    %130 = vmatprep.subr.mxu0 0.0
    %131 = vmatpush1.msra.mxu0 0.0
    %132 = vmatprep.subr.mxu0 0.0
    %133 = vmatpush1.msra.mxu0 0.0
    %134 = vmatprep.subr.mxu0 0.0
    %135 = vmatpush1.msra.mxu0 0.0
    %136 = vmatprep.subr.mxu0 0.0
    %137 = vmatpush1.msra.mxu0 0.0
    %138 = vmatprep.subr.mxu0 0.0
    %139 = vmatpush1.msra.mxu0 0.0
    %140 = vmatprep.subr.mxu0 0.0
    %141 = vmatpush1.msra.mxu0 0.0
    %142 = vmatprep.subr.mxu0 0.0
    %143 = vmatpush1.msra.mxu0 0.0
    %144 = vmatprep.subr.mxu0 0.0
    %145 = vmatpush1.msra.mxu0 0.0
    %146 = vmatprep.subr.mxu0 0.0
    %147 = vmatpush1.msra.mxu0 0.0
    %148 = vmatprep.subr.mxu0 0.0
    %149 = vmatpush1.msra.mxu0 0.0
    %150 = vmatprep.subr.mxu0 0.0
    %151 = vmatpush1.msra.mxu0 0.0
    %152 = vmatprep.subr.mxu0 0.0
    %153 = vmatpush1.msra.mxu0 0.0
    %154 = vmatprep.subr.mxu0 0.0
    %155 = vmatpush1.msra.mxu0 0.0
    %156 = vmatprep.mubr.f32.mxu0 0.0
    %157 = vmatmul.mubr.f32.gmra.mrb[0].mxu0 %v27
    %v158 = vpop.f32.mrb[0].mxu0
    %v159 = vadd.f32 0.0, %v158
    %v160 = vpop.f32.mrb[0].mxu0
    %v161 = vadd.f32 0.0, %v160
    %162 = vdwg.mxu0
    %163 = vmatprep.subr.mxu0 %v31
    %164 = vmatpush1.msra.mxu0 %v30
    %165 = vmatprep.subr.mxu0 %v35
    %166 = vmatpush1.msra.mxu0 %v34
    %167 = vmatprep.subr.mxu0 %v39
    %168 = vmatpush1.msra.mxu0 %v38
    %169 = vmatprep.subr.mxu0 %v43
    %170 = vmatpush1.msra.mxu0 %v42
    %171 = vmatprep.subr.mxu0 %v47
    %172 = vmatpush1.msra.mxu0 %v46
    %173 = vmatprep.subr.mxu0 %v51
    %174 = vmatpush1.msra.mxu0 %v50
    %175 = vmatprep.subr.mxu0 %v55
    %176 = vmatpush1.msra.mxu0 %v54
    %177 = vmatprep.subr.mxu0 %v59
    %178 = vmatpush1.msra.mxu0 %v58
    %179 = vmatprep.subr.mxu0 %v63
    %180 = vmatpush1.msra.mxu0 %v62
    %181 = vmatprep.subr.mxu0 %v67
    %182 = vmatpush1.msra.mxu0 %v66
    %183 = vmatprep.subr.mxu0 %v71
    %184 = vmatpush1.msra.mxu0 %v70
    %185 = vmatprep.subr.mxu0 %v75
    %186 = vmatpush1.msra.mxu0 %v74
    %187 = vmatprep.subr.mxu0 %v79
    %188 = vmatpush1.msra.mxu0 %v78
    %189 = vmatprep.subr.mxu0 %v83
    %190 = vmatpush1.msra.mxu0 %v82
    %191 = vmatprep.subr.mxu0 %v87
    %192 = vmatpush1.msra.mxu0 %v86
    %193 = vmatprep.subr.mxu0 %v91
    %194 = vmatpush1.msra.mxu0 %v90
    %195 = vmatprep.subr.mxu0 0.0
    %196 = vmatpush1.msra.mxu0 0.0
    %197 = vmatprep.subr.mxu0 0.0
    %198 = vmatpush1.msra.mxu0 0.0
    %199 = vmatprep.subr.mxu0 0.0
    %200 = vmatpush1.msra.mxu0 0.0
    %201 = vmatprep.subr.mxu0 0.0
    %202 = vmatpush1.msra.mxu0 0.0
    %203 = vmatprep.subr.mxu0 0.0
    %204 = vmatpush1.msra.mxu0 0.0
    %205 = vmatprep.subr.mxu0 0.0
    %206 = vmatpush1.msra.mxu0 0.0
    %207 = vmatprep.subr.mxu0 0.0
    %208 = vmatpush1.msra.mxu0 0.0
    %209 = vmatprep.subr.mxu0 0.0
    %210 = vmatpush1.msra.mxu0 0.0
    %211 = vmatprep.subr.mxu0 0.0
    %212 = vmatpush1.msra.mxu0 0.0
    %213 = vmatprep.subr.mxu0 0.0
    %214 = vmatpush1.msra.mxu0 0.0
    %215 = vmatprep.subr.mxu0 0.0
    %216 = vmatpush1.msra.mxu0 0.0
    %217 = vmatprep.subr.mxu0 0.0
    %218 = vmatpush1.msra.mxu0 0.0
    %219 = vmatprep.subr.mxu0 0.0
    %220 = vmatpush1.msra.mxu0 0.0
    %221 = vmatprep.subr.mxu0 0.0
    %222 = vmatpush1.msra.mxu0 0.0
    %223 = vmatprep.subr.mxu0 0.0
    %224 = vmatpush1.msra.mxu0 0.0
    %225 = vmatprep.subr.mxu0 0.0
    %226 = vmatpush1.msra.mxu0 0.0
    %227 = vmatprep.mubr.f32.mxu0 0.0
    %228 = vmatmul.mubr.f32.gmra.mrb[0].mxu0 %v27
    %v229 = vpop.f32.mrb[0].mxu0
    %v230 = vadd.f32 0.0, %v229
    %v231 = vpop.f32.mrb[0].mxu0
    %v232 = vadd.f32 0.0, %v231
    %233 = vdwg.mxu0
    %v234 = vmax.f32 %v159, %v161
    %v235 = vmax.f32 %v234, %v230
    %v236 = vmax.f32 %v235, %v232
    %v237 = vld [vmem:[%s2] sm:$0xff]
    %239 = vset.pattern.permute.xlu0 0
    %240 = vperm.xlu0 %239, %v237
    %v241 = vpop.permute.xlu0 %240
    %v243 = vadd.f32 %v236, %v241
    %v244 = vmax.f32 %v243, 0.0
    %v246 = vrot.slane %v244, 1
    %247 = vrot.lane.b32.xlu0 %v246, 64
    %v248 = vpop.permute.xlu0 %247
    %v250 = vrot.slane %v244, 2
    %v252 = vrot.slane %v244, 3
    %253 = vrot.lane.b32.xlu0 %v252, 64
    %v254 = vpop.permute.xlu0 %253
    %v256 = vrot.slane %v244, 4
    %v258 = vrot.slane %v244, 5
    %259 = vrot.lane.b32.xlu0 %v258, 64
    %v260 = vpop.permute.xlu0 %259
    %v262 = vrot.slane %v244, 6
    %v264 = vrot.slane %v244, 7
    %265 = vrot.lane.b32.xlu0 %v264, 64
    %v266 = vpop.permute.xlu0 %265
    %vm268 = vcmask 523264
    %v269 = vsel %vm268, %v244, %v248
    %v270 = vsel %vm268, %v250, %v254
    %v271 = vsel %vm268, %v256, %v260
    %v272 = vsel %vm268, %v262, %v266
    %273 = vrot.lane.b32.xlu0 %v244, 64
    %v274 = vpop.permute.xlu0 %273
    %277 = vrot.lane.b32.xlu0 %v250, 64
    %v278 = vpop.permute.xlu0 %277
    %281 = vrot.lane.b32.xlu0 %v256, 64
    %v282 = vpop.permute.xlu0 %281
    %285 = vrot.lane.b32.xlu0 %v262, 64
    %v286 = vpop.permute.xlu0 %285
    %v289 = vsel %vm268, %v274, %v246
    %v290 = vsel %vm268, %v278, %v252
    %v291 = vsel %vm268, %v282, %v258
    %v292 = vsel %vm268, %v286, %v264
    %v297 = vrot.slane %v289, 7
    %v298 = vrot.slane %v290, 7
    %v299 = vrot.slane %v291, 7
    %v300 = vrot.slane %v292, 7
    %vm305 = vcmask 1040384
    %v306 = vsel %vm305, %v269, %v297
    %v307 = vsel %vm305, %v270, %v298
    %v308 = vsel %vm305, %v271, %v299
    %v309 = vsel %vm305, %v272, %v300
    %v310 = vld [vmem:[%s3] sm:$0xff]
    %v311 = vld [vmem:[%s3 + $0x8] sm:$0xff]
    %v312 = vld [vmem:[%s3 + $0x10] sm:$0xff]
    %v313 = vld [vmem:[%s3 + $0x18] sm:$0xff]
    %v314 = vld [vmem:[%s3 + $0x20] sm:$0xff]
    %v315 = vld [vmem:[%s3 + $0x28] sm:$0xff]
    %v316 = vld [vmem:[%s3 + $0x30] sm:$0xff]
    %v317 = vld [vmem:[%s3 + $0x38] sm:$0xff]
    %v318 = vld [vmem:[%s3 + $0x40] sm:$0xff]
    %v319 = vld [vmem:[%s3 + $0x48] sm:$0xff]
    %v320 = vld [vmem:[%s3 + $0x50] sm:$0xff]
    %v321 = vld [vmem:[%s3 + $0x58] sm:$0xff]
    %v322 = vld [vmem:[%s3 + $0x60] sm:$0xff]
    %v323 = vld [vmem:[%s3 + $0x68] sm:$0xff]
    %v324 = vld [vmem:[%s3 + $0x70] sm:$0xff]
    %v325 = vld [vmem:[%s3 + $0x78] sm:$0xff]
    %v326 = vld [vmem:[%s3 + $0x80] sm:$0xff]
    %v327 = vld [vmem:[%s3 + $0x88] sm:$0xff]
    %v328 = vld [vmem:[%s3 + $0x90] sm:$0xff]
    %v329 = vld [vmem:[%s3 + $0x98] sm:$0xff]
    %v330 = vld [vmem:[%s3 + $0xa0] sm:$0xff]
    %v331 = vld [vmem:[%s3 + $0xa8] sm:$0xff]
    %v332 = vld [vmem:[%s3 + $0xb0] sm:$0xff]
    %v333 = vld [vmem:[%s3 + $0xb8] sm:$0xff]
    %v334 = vld [vmem:[%s3 + $0xc0] sm:$0xff]
    %v335 = vld [vmem:[%s3 + $0xc8] sm:$0xff]
    %v336 = vld [vmem:[%s3 + $0xd0] sm:$0xff]
    %v337 = vld [vmem:[%s3 + $0xd8] sm:$0xff]
    %v338 = vld [vmem:[%s3 + $0xe0] sm:$0xff]
    %v339 = vld [vmem:[%s3 + $0xe8] sm:$0xff]
    %v340 = vld [vmem:[%s3 + $0xf0] sm:$0xff]
    %v341 = vld [vmem:[%s3 + $0xf8] sm:$0xff]
    %v342 = vld [vmem:[%s3 + $0x100] sm:$0xff]
    %v343 = vld [vmem:[%s3 + $0x108] sm:$0xff]
    %v344 = vld [vmem:[%s3 + $0x110] sm:$0xff]
    %v345 = vld [vmem:[%s3 + $0x118] sm:$0xff]
    %v346 = vld [vmem:[%s3 + $0x120] sm:$0xff]
    %v347 = vld [vmem:[%s3 + $0x128] sm:$0xff]
    %v348 = vld [vmem:[%s3 + $0x130] sm:$0xff]
    %v349 = vld [vmem:[%s3 + $0x138] sm:$0xff]
    %v350 = vld [vmem:[%s3 + $0x140] sm:$0xff]
    %v351 = vld [vmem:[%s3 + $0x148] sm:$0xff]
    %v352 = vld [vmem:[%s3 + $0x150] sm:$0xff]
    %v353 = vld [vmem:[%s3 + $0x158] sm:$0xff]
    %v354 = vld [vmem:[%s3 + $0x160] sm:$0xff]
    %v355 = vld [vmem:[%s3 + $0x168] sm:$0xff]
    %v356 = vld [vmem:[%s3 + $0x170] sm:$0xff]
    %v357 = vld [vmem:[%s3 + $0x178] sm:$0xff]
    %v358 = vld [vmem:[%s3 + $0x180] sm:$0xff]
    %v359 = vld [vmem:[%s3 + $0x188] sm:$0xff]
    %v360 = vld [vmem:[%s3 + $0x190] sm:$0xff]
    %v361 = vld [vmem:[%s3 + $0x198] sm:$0xff]
    %v362 = vld [vmem:[%s3 + $0x1a0] sm:$0xff]
    %v363 = vld [vmem:[%s3 + $0x1a8] sm:$0xff]
    %v364 = vld [vmem:[%s3 + $0x1b0] sm:$0xff]
    %v365 = vld [vmem:[%s3 + $0x1b8] sm:$0xff]
    %v366 = vld [vmem:[%s3 + $0x1c0] sm:$0xff]
    %v367 = vld [vmem:[%s3 + $0x1c8] sm:$0xff]
    %v368 = vld [vmem:[%s3 + $0x1d0] sm:$0xff]
    %v369 = vld [vmem:[%s3 + $0x1d8] sm:$0xff]
    %v370 = vld [vmem:[%s3 + $0x1e0] sm:$0xff]
    %v371 = vld [vmem:[%s3 + $0x1e8] sm:$0xff]
    %v372 = vld [vmem:[%s3 + $0x1f0] sm:$0xff]
    %v373 = vld [vmem:[%s3 + $0x1f8] sm:$0xff]
    %v374 = vld [vmem:[%s4] sm:$0x1]
    %v376 = vlaneseq
    %v377 = vshrl.u32 %v376, 7
    %v378 = vsub.s32 0, %v377
    %v379 = vrot.slane %v374, %v378
    %381 = vmatprep.subr.mxu0 0.0
    %382 = vmatpush1.msra.mxu0 %v310
    %383 = vmatprep.subr.mxu0 0.0
    %384 = vmatpush1.msra.mxu0 %v311
    %385 = vmatprep.subr.mxu0 0.0
    %386 = vmatpush1.msra.mxu0 %v312
    %387 = vmatprep.subr.mxu0 0.0
    %388 = vmatpush1.msra.mxu0 %v313
    %389 = vmatprep.subr.mxu0 0.0
    %390 = vmatpush1.msra.mxu0 %v314
    %391 = vmatprep.subr.mxu0 0.0
    %392 = vmatpush1.msra.mxu0 %v315
    %393 = vmatprep.subr.mxu0 0.0
    %394 = vmatpush1.msra.mxu0 %v316
    %395 = vmatprep.subr.mxu0 0.0
    %396 = vmatpush1.msra.mxu0 %v317
    %397 = vmatprep.subr.mxu0 0.0
    %398 = vmatpush1.msra.mxu0 %v318
    %399 = vmatprep.subr.mxu0 0.0
    %400 = vmatpush1.msra.mxu0 %v319
    %401 = vmatprep.subr.mxu0 0.0
    %402 = vmatpush1.msra.mxu0 %v320
    %403 = vmatprep.subr.mxu0 0.0
    %404 = vmatpush1.msra.mxu0 %v321
    %405 = vmatprep.subr.mxu0 0.0
    %406 = vmatpush1.msra.mxu0 %v322
    %407 = vmatprep.subr.mxu0 0.0
    %408 = vmatpush1.msra.mxu0 %v323
    %409 = vmatprep.subr.mxu0 0.0
    %410 = vmatpush1.msra.mxu0 %v324
    %411 = vmatprep.subr.mxu0 0.0
    %412 = vmatpush1.msra.mxu0 %v325
    %413 = vmatprep.subr.mxu0 0.0
    %414 = vmatpush1.msra.mxu0 %v326
    %415 = vmatprep.subr.mxu0 0.0
    %416 = vmatpush1.msra.mxu0 %v327
    %417 = vmatprep.subr.mxu0 0.0
    %418 = vmatpush1.msra.mxu0 %v328
    %419 = vmatprep.subr.mxu0 0.0
    %420 = vmatpush1.msra.mxu0 %v329
    %421 = vmatprep.subr.mxu0 0.0
    %422 = vmatpush1.msra.mxu0 %v330
    %423 = vmatprep.subr.mxu0 0.0
    %424 = vmatpush1.msra.mxu0 %v331
    %425 = vmatprep.subr.mxu0 0.0
    %426 = vmatpush1.msra.mxu0 %v332
    %427 = vmatprep.subr.mxu0 0.0
    %428 = vmatpush1.msra.mxu0 %v333
    %429 = vmatprep.subr.mxu0 0.0
    %430 = vmatpush1.msra.mxu0 %v334
    %431 = vmatprep.subr.mxu0 0.0
    %432 = vmatpush1.msra.mxu0 %v335
    %433 = vmatprep.subr.mxu0 0.0
    %434 = vmatpush1.msra.mxu0 %v336
    %435 = vmatprep.subr.mxu0 0.0
    %436 = vmatpush1.msra.mxu0 %v337
    %437 = vmatprep.subr.mxu0 0.0
    %438 = vmatpush1.msra.mxu0 %v338
    %439 = vmatprep.subr.mxu0 0.0
    %440 = vmatpush1.msra.mxu0 %v339
    %441 = vmatprep.subr.mxu0 0.0
    %442 = vmatpush1.msra.mxu0 %v340
    %443 = vmatprep.subr.mxu0 0.0
    %444 = vmatpush1.msra.mxu0 %v341
    %445 = vmatprep.mubr.f32.mxu0 %v307
    %446 = vmatmul.mubr.f32.gmra.mrb[0].mxu0 %v306
    %v447 = vpop.f32.mrb[0].mxu0
    %v448 = vadd.f32 %v379, %v447
    %v449 = vpop.f32.mrb[0].mxu0
    %450 = vdwg.mxu0
    %451 = vmatprep.subr.mxu0 0.0
    %452 = vmatpush1.msra.mxu0 %v342
    %453 = vmatprep.subr.mxu0 0.0
    %454 = vmatpush1.msra.mxu0 %v343
    %455 = vmatprep.subr.mxu0 0.0
    %456 = vmatpush1.msra.mxu0 %v344
    %457 = vmatprep.subr.mxu0 0.0
    %458 = vmatpush1.msra.mxu0 %v345
    %459 = vmatprep.subr.mxu0 0.0
    %460 = vmatpush1.msra.mxu0 %v346
    %461 = vmatprep.subr.mxu0 0.0
    %462 = vmatpush1.msra.mxu0 %v347
    %463 = vmatprep.subr.mxu0 0.0
    %464 = vmatpush1.msra.mxu0 %v348
    %465 = vmatprep.subr.mxu0 0.0
    %466 = vmatpush1.msra.mxu0 %v349
    %467 = vmatprep.subr.mxu0 0.0
    %468 = vmatpush1.msra.mxu0 %v350
    %469 = vmatprep.subr.mxu0 0.0
    %470 = vmatpush1.msra.mxu0 %v351
    %471 = vmatprep.subr.mxu0 0.0
    %472 = vmatpush1.msra.mxu0 %v352
    %473 = vmatprep.subr.mxu0 0.0
    %474 = vmatpush1.msra.mxu0 %v353
    %475 = vmatprep.subr.mxu0 0.0
    %476 = vmatpush1.msra.mxu0 %v354
    %477 = vmatprep.subr.mxu0 0.0
    %478 = vmatpush1.msra.mxu0 %v355
    %479 = vmatprep.subr.mxu0 0.0
    %480 = vmatpush1.msra.mxu0 %v356
    %481 = vmatprep.subr.mxu0 0.0
    %482 = vmatpush1.msra.mxu0 %v357
    %483 = vmatprep.subr.mxu0 0.0
    %484 = vmatpush1.msra.mxu0 %v358
    %485 = vmatprep.subr.mxu0 0.0
    %486 = vmatpush1.msra.mxu0 %v359
    %487 = vmatprep.subr.mxu0 0.0
    %488 = vmatpush1.msra.mxu0 %v360
    %489 = vmatprep.subr.mxu0 0.0
    %490 = vmatpush1.msra.mxu0 %v361
    %491 = vmatprep.subr.mxu0 0.0
    %492 = vmatpush1.msra.mxu0 %v362
    %493 = vmatprep.subr.mxu0 0.0
    %494 = vmatpush1.msra.mxu0 %v363
    %495 = vmatprep.subr.mxu0 0.0
    %496 = vmatpush1.msra.mxu0 %v364
    %497 = vmatprep.subr.mxu0 0.0
    %498 = vmatpush1.msra.mxu0 %v365
    %499 = vmatprep.subr.mxu0 0.0
    %500 = vmatpush1.msra.mxu0 %v366
    %501 = vmatprep.subr.mxu0 0.0
    %502 = vmatpush1.msra.mxu0 %v367
    %503 = vmatprep.subr.mxu0 0.0
    %504 = vmatpush1.msra.mxu0 %v368
    %505 = vmatprep.subr.mxu0 0.0
    %506 = vmatpush1.msra.mxu0 %v369
    %507 = vmatprep.subr.mxu0 0.0
    %508 = vmatpush1.msra.mxu0 %v370
    %509 = vmatprep.subr.mxu0 0.0
    %510 = vmatpush1.msra.mxu0 %v371
    %511 = vmatprep.subr.mxu0 0.0
    %512 = vmatpush1.msra.mxu0 %v372
    %513 = vmatprep.subr.mxu0 0.0
    %514 = vmatpush1.msra.mxu0 %v373
    %515 = vmatprep.mubr.f32.mxu0 %v309
    %516 = vmatmul.mubr.f32.gmra.mrb[0].mxu0 %v308
    %v517 = vpop.f32.mrb[0].mxu0
    %v518 = vadd.f32 %v448, %v517
    %v519 = vpop.f32.mrb[0].mxu0
    %520 = vdwg.mxu0
    %v521 = vmax.f32 %v518, 0.0
    %v522 = vld [vmem:[%s5] sm:$0xff]
    %v523 = vld [vmem:[%s5 + $0x8] sm:$0xff]
    %v524 = vld [vmem:[%s5 + $0x10] sm:$0xff]
    %v525 = vld [vmem:[%s5 + $0x18] sm:$0xff]
    %v526 = vld [vmem:[%s6] sm:$0x1]
    %v528 = vlaneseq
    %v529 = vshrl.u32 %v528, 7
    %v530 = vsub.s32 0, %v529
    %v531 = vrot.slane %v526, %v530
    %vm533 = vcmask 261120
    %v535 = vsel %vm533, %v521, 0
    %537 = vmatprep.subr.mxu0 0.0
    %538 = vmatpush1.msra.mxu0 %v522
    %539 = vmatprep.subr.mxu0 0.0
    %540 = vmatpush1.msra.mxu0 %v523
    %541 = vmatprep.subr.mxu0 0.0
    %542 = vmatpush1.msra.mxu0 %v524
    %543 = vmatprep.subr.mxu0 0.0
    %544 = vmatpush1.msra.mxu0 %v525
    %545 = vmatprep.subr.mxu0 0.0
    %546 = vmatpush1.msra.mxu0 0.0
    %547 = vmatprep.subr.mxu0 0.0
    %548 = vmatpush1.msra.mxu0 0.0
    %549 = vmatprep.subr.mxu0 0.0
    %550 = vmatpush1.msra.mxu0 0.0
    %551 = vmatprep.subr.mxu0 0.0
    %552 = vmatpush1.msra.mxu0 0.0
    %553 = vmatprep.subr.mxu0 0.0
    %554 = vmatpush1.msra.mxu0 0.0
    %555 = vmatprep.subr.mxu0 0.0
    %556 = vmatpush1.msra.mxu0 0.0
    %557 = vmatprep.subr.mxu0 0.0
    %558 = vmatpush1.msra.mxu0 0.0
    %559 = vmatprep.subr.mxu0 0.0
    %560 = vmatpush1.msra.mxu0 0.0
    %561 = vmatprep.subr.mxu0 0.0
    %562 = vmatpush1.msra.mxu0 0.0
    %563 = vmatprep.subr.mxu0 0.0
    %564 = vmatpush1.msra.mxu0 0.0
    %565 = vmatprep.subr.mxu0 0.0
    %566 = vmatpush1.msra.mxu0 0.0
    %567 = vmatprep.subr.mxu0 0.0
    %568 = vmatpush1.msra.mxu0 0.0
    %569 = vmatprep.subr.mxu0 0.0
    %570 = vmatpush1.msra.mxu0 0.0
    %571 = vmatprep.subr.mxu0 0.0
    %572 = vmatpush1.msra.mxu0 0.0
    %573 = vmatprep.subr.mxu0 0.0
    %574 = vmatpush1.msra.mxu0 0.0
    %575 = vmatprep.subr.mxu0 0.0
    %576 = vmatpush1.msra.mxu0 0.0
    %577 = vmatprep.subr.mxu0 0.0
    %578 = vmatpush1.msra.mxu0 0.0
    %579 = vmatprep.subr.mxu0 0.0
    %580 = vmatpush1.msra.mxu0 0.0
    %581 = vmatprep.subr.mxu0 0.0
    %582 = vmatpush1.msra.mxu0 0.0
    %583 = vmatprep.subr.mxu0 0.0
    %584 = vmatpush1.msra.mxu0 0.0
    %585 = vmatprep.subr.mxu0 0.0
    %586 = vmatpush1.msra.mxu0 0.0
    %587 = vmatprep.subr.mxu0 0.0
    %588 = vmatpush1.msra.mxu0 0.0
    %589 = vmatprep.subr.mxu0 0.0
    %590 = vmatpush1.msra.mxu0 0.0
    %591 = vmatprep.subr.mxu0 0.0
    %592 = vmatpush1.msra.mxu0 0.0
    %593 = vmatprep.subr.mxu0 0.0
    %594 = vmatpush1.msra.mxu0 0.0
    %595 = vmatprep.subr.mxu0 0.0
    %596 = vmatpush1.msra.mxu0 0.0
    %597 = vmatprep.subr.mxu0 0.0
    %598 = vmatpush1.msra.mxu0 0.0
    %599 = vmatprep.subr.mxu0 0.0
    %600 = vmatpush1.msra.mxu0 0.0
    %601 = vmatprep.mubr.f32.mxu0 0.0
    %602 = vmatmul.mubr.f32.gmra.mrb[0].mxu0 %v535
    %v603 = vpop.f32.mrb[0].mxu0
    %v604 = vadd.f32 %v531, %v603
    %v605 = vpop.f32.mrb[0].mxu0
    %606 = vdwg.mxu0
    %vm607 = vcmask 74752
    %608 = vst.msk [vmem:[#allocation2] sm:$0x3] %vm607, %v604
    // Predicated region
    $region30: #{tpu_custom_call.1} parent=1 // pred_check
      _
    $region31: #{tpu_custom_call.1} parent=1 // pred_check_branch
      %610 = sbr.rel (0) target = $region33
    $region32: #{tpu_custom_call.1} parent=1 // pred_region
      %s612 = ssub.s32 32, 32
      %613 = vsyncadd [#allocation3], %s612
      %s615 = sshll.u32 [#allocation2], 4
      %s616 = int_to_ptr.vmem [resolvable:$true] %s615
      %618 = dma.vmem_to_hbm [thread:$0]  %s616, 32, %s7, [#allocation3]
    $region33: #{tpu_custom_call.1} parent=1 // pred_fallthru
      _
    // Predicated region
    $region34: #{tpu_custom_call.1} parent=1 // pred_check
      _
    $region35: #{tpu_custom_call.1} parent=1 // pred_check_branch
      %620 = sbr.rel (0) target = $region37
    $region36: #{tpu_custom_call.1} parent=1 // pred_region
      %621 = dma.done [#allocation3], 32
    $region37: #{tpu_custom_call.1} parent=1 // pred_fallthru
      _
    %622 = vsyncpa [#allocation3], 1

</llo_original>
